<compile_context>
chip_gen: v7x
topology: tpu7x:2x2x1
jax: 0.10.0
libtpu: 0.0.40
codegen_flags: <defaults>
</compile_context>

<pallas_src>
import jax
import jax.numpy as jnp
from jax.experimental import pallas as pl
from jax.experimental.pallas import tpu as pltpu


def addmm_kernel(x1_ref, b1_ref, x2_ref, o_ref):
    # Fused bias + matmul on the MXU: out_tile = x1_tile + b1_tile @ x2_tile
    acc = jnp.dot(b1_ref[...], x2_ref[...], preferred_element_type=jnp.float32)
    o_ref[...] = (x1_ref[...].astype(jnp.float32) + acc).astype(o_ref.dtype)


def addmm_pallas(x1, b1, x2):
    """out = x1 + b1 @ x2.  b1:(M,K), x2:(K,N), x1:(M,N)."""
    M, K = b1.shape
    K2, N = x2.shape
    assert K == K2 and x1.shape == (M, N)

    # Everything fits in VMEM, so use whole-array blocks along M and K.
    # Split N into two lane-dense tiles (when N is a multiple of 256) so the
    # single "parallel" grid axis can be sharded across v7x's two TensorCores;
    # otherwise use one full-width step.
    n_split = 2 if (N % 256 == 0) else 1
    tn = N // n_split
    grid = (n_split,)

    cost = pl.CostEstimate(
        flops=2 * M * N * K,
        transcendentals=0,
        bytes_accessed=x1.dtype.itemsize * (2 * M * N + M * K + K * N),
    )

    return pl.pallas_call(
        addmm_kernel,
        out_shape=jax.ShapeDtypeStruct((M, N), x1.dtype),
        grid_spec=pltpu.PrefetchScalarGridSpec(
            num_scalar_prefetch=0,
            grid=grid,
            in_specs=[
                pl.BlockSpec((M, tn), lambda j: (0, j)),   # x1 (bias) tile
                pl.BlockSpec((M, K), lambda j: (0, 0)),    # b1: full (K=12 tiny)
                pl.BlockSpec((K, tn), lambda j: (0, j)),   # x2 tile (full K)
            ],
            out_specs=pl.BlockSpec((M, tn), lambda j: (0, j)),
        ),
        compiler_params=pltpu.CompilerParams(
            dimension_semantics=("parallel",),
        ),
        input_output_aliases={0: 0},   # reuse x1's HBM buffer for the output
        cost_estimate=cost,
    )(x1, b1, x2)


def model_forward(x1, x2, b1, b2):
    """Mirror of Model.forward.

    x1: (1, M, N), x2: (1, K, N), b1: (1, M, K), b2: scalar.
    v1 = addmm(x1, b1, x2);  v2 = cat([v1], dim=b2.dim()-1)  (identity).
    """
    del b2  # cat of a single tensor is the identity regardless of the axis.
    v1 = addmm_pallas(x1[0], b1[0], x2[0])
    # expand_dims (metadata only) instead of a single-operand concatenate.
    return v1[None]


if __name__ == "__main__":
    # Small shapes consistent with the module's (256, 12, 1024) pattern.
    M, K, N = 128, 12, 256
    key = jax.random.PRNGKey(0)
    k1, k2, k3 = jax.random.split(key, 3)

    x1 = jax.random.normal(k1, (1, M, N), dtype=jnp.float32)   # "input" bias term
    b1 = jax.random.normal(k2, (1, M, K), dtype=jnp.float32)   # mat1
    x2 = jax.random.normal(k3, (1, K, N), dtype=jnp.float32)   # mat2
    b2 = jnp.asarray(3, dtype=jnp.int32)                       # scalar -> cat dim = -1

    # Reference, computed (and materialized) before x1 is donated below.
    ref = jax.block_until_ready(x1[0] + b1[0] @ x2[0])

    # Donate x1 so the input_output_alias in the kernel is a true in-place reuse.
    fwd = jax.jit(model_forward, donate_argnums=(0,))
    out = jax.block_until_ready(fwd(x1, x2, b1, b2))

    assert out.shape == (1, M, N), out.shape
    assert jnp.allclose(out[0], ref, atol=1e-4, rtol=1e-4)

    print("KERNEL_OK")
</pallas_src>

<mosaic_0001>
module attributes {stable_mosaic.version = 11 : i64} {
  func.func @addmm_kernel(%arg0: i32, %arg1: memref<128x128xf32, #tpu.memory_space<vmem>>, %arg2: memref<128x12xf32, #tpu.memory_space<vmem>>, %arg3: memref<12x128xf32, #tpu.memory_space<vmem>>, %arg4: memref<128x128xf32, #tpu.memory_space<vmem>>) attributes {dimension_semantics = [#tpu.dimension_semantics<parallel>], iteration_bounds = array<i64: 2>, scalar_prefetch = 0 : i64, scratch_operands = 0 : i64, tpu.core_type = #tpu.core_type<tc>, window_params = [{transform_indices = @transform_0, window_bounds = array<i64: 128, 128>}, {pipeline_mode = #tpu.pipeline_mode<synchronous>, transform_indices = @transform_1, window_bounds = array<i64: 128, 12>}, {transform_indices = @transform_2, window_bounds = array<i64: 12, 128>}, {transform_indices = @transform_3, window_bounds = array<i64: 128, 128>}]} {
    %c0 = arith.constant 0 : index
    %c0_0 = arith.constant 0 : index
    %0 = vector.load %arg2[%c0, %c0_0] : memref<128x12xf32, #tpu.memory_space<vmem>>, vector<128x12xf32>
    %c0_1 = arith.constant 0 : index
    %c0_2 = arith.constant 0 : index
    %1 = vector.load %arg3[%c0_1, %c0_2] : memref<12x128xf32, #tpu.memory_space<vmem>>, vector<12x128xf32>
    %cst = arith.constant dense<0.000000e+00> : vector<128x128xf32>
    %2 = tpu.matmul %0, %1, %cst {dimension_numbers = #tpu.dot_dimension_numbers<[1], [0], [0], [1], [0, 0, 1, 1], [], []>} : vector<128x12xf32>, vector<12x128xf32>, vector<128x128xf32> -> vector<128x128xf32>
    %c0_3 = arith.constant 0 : index
    %c0_4 = arith.constant 0 : index
    %3 = vector.load %arg1[%c0_3, %c0_4] : memref<128x128xf32, #tpu.memory_space<vmem>>, vector<128x128xf32>
    %4 = arith.addf %3, %2 : vector<128x128xf32>
    %c0_5 = arith.constant 0 : index
    %c0_6 = arith.constant 0 : index
    %5 = vector.load %arg4[%c0_5, %c0_6] : memref<128x128xf32, #tpu.memory_space<vmem>>, vector<128x128xf32>
    tpu.vector_store %arg4[%c0_5, %c0_6], %4 {strides = array<i32>} : memref<128x128xf32, #tpu.memory_space<vmem>>, vector<128x128xf32>,
    return
  }
  func.func @transform_0(%arg0: i32) -> (i32, i32) {
    %c0_i32 = arith.constant 0 : i32
    %c0_i32_0 = arith.constant 0 : i32
    return %c0_i32, %arg0 : i32, i32
  }
  func.func @transform_1(%arg0: i32) -> (i32, i32) {
    %c0_i32 = arith.constant 0 : i32
    %c0_i32_0 = arith.constant 0 : i32
    %c0_i32_1 = arith.constant 0 : i32
    return %c0_i32, %c0_i32_0 : i32, i32
  }
  func.func @transform_2(%arg0: i32) -> (i32, i32) {
    %c0_i32 = arith.constant 0 : i32
    %c0_i32_0 = arith.constant 0 : i32
    return %c0_i32, %arg0 : i32, i32
  }
  func.func @transform_3(%arg0: i32) -> (i32, i32) {
    %c0_i32 = arith.constant 0 : i32
    %c0_i32_0 = arith.constant 0 : i32
    return %c0_i32, %arg0 : i32, i32
  }
}

</mosaic_0001>

<llo_original>
// kernel: model_forward.1
$region0: #{model_forward.1}
  #allocation0 [shape = 'u32[]', space=smem, size = 0x4, offset = 0x4, fixed_abs, tag = 'smem constant byte address 0x4 - core index']
  #allocation1 [shape = 'u32[144,128]{1,0:T(1,128)}', space=vmem, size = 0x12000, scoped, tag = 'internal scratch']
  %s0 = inlined_call_operand.hbm [shape: f32[128,256], index: 0, kind: input, shape index: {}, may-alias: {0,3}]
  %s1 = inlined_call_operand.vmem [shape: f32[128,12], index: 1, kind: input, shape index: {}]
  %s2 = inlined_call_operand.vmem [shape: f32[12,256], index: 2, kind: input, shape index: {}]
  %s3 = inlined_call_operand.hbm [shape: f32[128,256], index: 3, kind: output, shape index: {}, may-alias: {0,3}]
  %s4 = sld [smem:[#allocation0]]
  $region87: #{model_forward.1} parent=0
    _
  %s6 = ssub.s32 1, %s4
  %s7 = scalar_select 0, %s6, %s4
  $region1: #{model_forward.1} parent=0
    #allocation2 [shape = 'u8[131072]{0}', space=vmem, size = 0x20000, scoped, tag = 'input window, operand 0']
    #allocation3 [shape = 's32[2]{0}', space=sflag, size = 0x8, scoped, tag = 'scoped memory for model_forward.1']
    #allocation4 [shape = 's32[2]{0}', space=sflag, size = 0x8, scoped, tag = 'scoped memory for model_forward.1']
    #allocation5 [shape = 'u8[16384]{0}', space=vmem, size = 0x4000, scoped, tag = 'input window, operand 2']
    #allocation6 [shape = 'u8[131072]{0}', space=vmem, size = 0x20000, scoped, tag = 'output window, operand 0']
    %8 = vsyncpa [#allocation3], 0
    %s9 = scalar_lea.sflag [#allocation3], 1
    %10 = vsyncpa %s9, 0
    %11 = vsyncpa [#allocation4], 0
    %s12 = scalar_lea.sflag [#allocation4], 1
    %13 = vsyncpa %s12, 0
    loop: start=0, step=1, limit=4
    $region2: #{model_forward.1} parent=1 // loop_pre_header
      _
    $region3: #{model_forward.1} parent=1 // loop_header
      %s15 = sphi 0, %s19
      %p16 = scmp.ge.s32.totalorder %s15, 4
      %s25 = sphi 0, %s27
      %s28 = sphi 0, %s25
      %s29 = sphi 0, %s28
      %s45 = sphi 0, %s29
      %s49 = sphi 0, %s49
      %s51 = sphi 0, %s49
      %s52 = sphi 0, %s51
      %s66 = sphi 0, %s52
      %s72 = sphi 0, %s74
      %s75 = sphi 0, %s72
      %s76 = sphi 0, %s75
      %s92 = sphi 0, %s76
      %s98 = sphi 0, %s100
      %s101 = sphi 0, %s98
      %s102 = sphi 0, %s101
      %s118 = sphi 0, %s102
    $region4: #{model_forward.1} parent=1 // loop_header_branch
      %18 = sbr.rel (%p16) target = $region8
    $region5: #{model_forward.1} parent=1 // loop_body
      %s20 = ssub.s32 %s15, 1
      %s21 = ssub.s32 %s15, 2
      %s22 = sadd.s32 %s15, 1
      %s23 = ssub.s32 %s15, %s22
      %p24 = scmp.eq.s32.totalorder %s23, 0
      %s26 = sadd.s32 %s25, 1
      %s27 = scalar_select %p24, %s25, %s26
      %p30 = pneg %p24
      %p31 = scmp.eq.s32.totalorder %s15, 1
      %p32 = por %p30, %p31
      %p33 = scmp.ne.s32.totalorder %s25, %s28
      %p34 = scmp.eq.s32.totalorder %s15, 0
      %p35 = por %p33, %p34
      %p36 = scmp.ne.s32.totalorder %s25, %s28
      %p37 = scmp.eq.s32.totalorder %s20, 1
      %p38 = por %p36, %p37
      %p39 = scmp.ne.s32.totalorder %s28, %s29
      %p40 = scmp.eq.s32.totalorder %s20, 0
      %p41 = por %p39, %p40
      %p42 = scmp.ne.s32.totalorder %s28, %s29
      %p43 = scmp.eq.s32.totalorder %s21, 1
      %p44 = por %p42, %p43
      %p46 = scmp.ne.s32.totalorder %s29, %s45
      %p47 = scmp.eq.s32.totalorder %s21, 0
      %p48 = por %p46, %p47
      %s50 = sadd.s32 %s49, 1
      %p53 = scmp.eq.s32.totalorder %s15, 1
      %p54 = scmp.ne.s32.totalorder %s49, %s51
      %p55 = scmp.eq.s32.totalorder %s15, 0
      %p56 = por %p54, %p55
      %p57 = scmp.ne.s32.totalorder %s49, %s51
      %p58 = scmp.eq.s32.totalorder %s20, 1
      %p59 = por %p57, %p58
      %p60 = scmp.ne.s32.totalorder %s51, %s52
      %p61 = scmp.eq.s32.totalorder %s20, 0
      %p62 = por %p60, %p61
      %p63 = scmp.ne.s32.totalorder %s51, %s52
      %p64 = scmp.eq.s32.totalorder %s21, 1
      %p65 = por %p63, %p64
      %p67 = scmp.ne.s32.totalorder %s52, %s66
      %p68 = scmp.eq.s32.totalorder %s21, 0
      %p69 = por %p67, %p68
      %s70 = ssub.s32 %s15, %s22
      %p71 = scmp.eq.s32.totalorder %s70, 0
      %s73 = sadd.s32 %s72, 1
      %s74 = scalar_select %p71, %s72, %s73
      %p77 = pneg %p71
      %p78 = scmp.eq.s32.totalorder %s15, 1
      %p79 = por %p77, %p78
      %p80 = scmp.ne.s32.totalorder %s72, %s75
      %p81 = scmp.eq.s32.totalorder %s15, 0
      %p82 = por %p80, %p81
      %p83 = scmp.ne.s32.totalorder %s72, %s75
      %p84 = scmp.eq.s32.totalorder %s20, 1
      %p85 = por %p83, %p84
      %p86 = scmp.ne.s32.totalorder %s75, %s76
      %p87 = scmp.eq.s32.totalorder %s20, 0
      %p88 = por %p86, %p87
      %p89 = scmp.ne.s32.totalorder %s75, %s76
      %p90 = scmp.eq.s32.totalorder %s21, 1
      %p91 = por %p89, %p90
      %p93 = scmp.ne.s32.totalorder %s76, %s92
      %p94 = scmp.eq.s32.totalorder %s21, 0
      %p95 = por %p93, %p94
      %s96 = ssub.s32 %s15, %s22
      %p97 = scmp.eq.s32.totalorder %s96, 0
      %s99 = sadd.s32 %s98, 1
      %s100 = scalar_select %p97, %s98, %s99
      %p103 = pneg %p97
      %p104 = scmp.eq.s32.totalorder %s15, 1
      %p105 = por %p103, %p104
      %p106 = scmp.ne.s32.totalorder %s98, %s101
      %p107 = scmp.eq.s32.totalorder %s15, 0
      %p108 = por %p106, %p107
      %p109 = scmp.ne.s32.totalorder %s98, %s101
      %p110 = scmp.eq.s32.totalorder %s20, 1
      %p111 = por %p109, %p110
      %p112 = scmp.ne.s32.totalorder %s101, %s102
      %p113 = scmp.eq.s32.totalorder %s20, 0
      %p114 = por %p112, %p113
      %p115 = scmp.ne.s32.totalorder %s101, %s102
      %p116 = scmp.eq.s32.totalorder %s21, 1
      %p117 = por %p115, %p116
      %p119 = scmp.ne.s32.totalorder %s102, %s118
      %p120 = scmp.eq.s32.totalorder %s21, 0
      %p121 = por %p119, %p120
      %p122 = scmp.le.s32.totalorder 1, %s15
      %p123 = scmp.lt.s32.totalorder %s15, 3
      %p124 = pnand %p122, %p123
      %p125 = pneg %p124
      // Predicated region
      $region9: #{model_forward.1} parent=5 // pred_check
        _
      $region10: #{model_forward.1} parent=5 // pred_check_branch
        %127 = sbr.rel (%p124) target = $region12
      $region11: #{model_forward.1} parent=5 // pred_region
        %s128 = ssub.s32 %s15, 1
        // Predicated region
        $region13: #{model_forward.1} parent=11 // pred_check
          %p129 = pneg %p62
        $region14: #{model_forward.1} parent=11 // pred_check_branch
          %131 = sbr.rel (%p129) target = $region16
        $region15: #{model_forward.1} parent=11 // pred_region
          _
        $region16: #{model_forward.1} parent=11 // pred_fallthru
          _
      $region12: #{model_forward.1} parent=5 // pred_fallthru
        _
      %p132 = scmp.lt.s32.totalorder %s15, 2
      // Predicated region
      $region17: #{model_forward.1} parent=5 // pred_check
        %p133 = pneg %p132
      $region18: #{model_forward.1} parent=5 // pred_check_branch
        %135 = sbr.rel (%p133) target = $region20
      $region19: #{model_forward.1} parent=5 // pred_region
        // Predicated region
        $region21: #{model_forward.1} parent=19 // pred_check
          %p136 = pneg %p35
        $region22: #{model_forward.1} parent=19 // pred_check_branch
          %138 = sbr.rel (%p136) target = $region24
        $region23: #{model_forward.1} parent=19 // pred_region
          %s139 = sand.u32 %s25, 1
          %s140 = scalar_lea.sflag [#allocation3], %s139
          %s141 = sand.u32 %s25, 1
          %s142 = smul.addr %s141, 128
          %s143 = scalar_lea.vmem [#allocation2], %s142
          %s145 = ssub.s32 2048, 2048
          %146 = vsyncadd %s140, %s145
          %s147 = smul.addr %s15, 128
          %s148 = scalar_lea.hbm %s0, %s147
          %s149 = sshll.u32 %s143, 4
          %s150 = int_to_ptr.vmem [resolvable:$true] %s149
          %155 = dma.hbm_to_vmem [thread:$0]  %s148, 2048, %s150, %s140, 256, 128, 8
        $region24: #{model_forward.1} parent=19 // pred_fallthru
          _
        // Predicated region
        $region25: #{model_forward.1} parent=19 // pred_check
          %p156 = pneg %p82
        $region26: #{model_forward.1} parent=19 // pred_check_branch
          %158 = sbr.rel (%p156) target = $region28
        $region27: #{model_forward.1} parent=19 // pred_region
          %s159 = sand.u32 %s72, 1
          %s160 = sand.u32 %s72, 1
          %s161 = smul.addr %s160, 16
          %s162 = scalar_lea.vmem [#allocation5], %s161
          %s163 = smul.addr %s15, 8
          %s164 = scalar_lea.vmem %s2, %s163
          // Predicated region
          $region29: #{model_forward.1} parent=27 // pred_check
            _
          $region30: #{model_forward.1} parent=27 // pred_check_branch
            %166 = sbr.rel (0) target = $region32
          $region31: #{model_forward.1} parent=27 // pred_region
            // Predicated region
            $region33: #{model_forward.1} parent=31 // pred_check
              _
            $region34: #{model_forward.1} parent=31 // pred_check_branch
              %168 = sbr.rel (0) target = $region36
            $region35: #{model_forward.1} parent=31 // pred_region
              // Predicated region
              $region48: #{model_forward.1} parent=35 // pred_check
                _
              $region49: #{model_forward.1} parent=35 // pred_check_branch
                %185 = sbr.rel (0) target = $region51
              $region50: #{model_forward.1} parent=35 // pred_region
                loop: start=0, step=1, limit=1
                $region52: #{model_forward.1} parent=50 // loop_pre_header
                  _
                $region53: #{model_forward.1} parent=50 // loop_header
                  %s187 = sphi 0, %s191
                  %p188 = scmp.ge.s32.totalorder %s187, 1
                  %s192 = sphi %s164, %s164
                  %s193 = sphi %s162, %s162
                $region54: #{model_forward.1} parent=50 // loop_header_branch
                  %190 = sbr.rel (%p188) target = $region58
                $region55: #{model_forward.1} parent=50 // loop_body
                  %v194 = vld [vmem:[%s192] sm:$0xff]
                  %195 = vst [vmem:[%s193] sm:$0xff] %v194
                  %v196 = vld [vmem:[%s192 + $0x10] sm:$0xff]
                  %197 = vst [vmem:[%s193 + $0x8] sm:$0xff] %v196
                $region56: #{model_forward.1} parent=50 // loop_footer
                  %s191 = sadd.s32 1, %s187
                $region57: #{model_forward.1} parent=50 // loop_footer_branch
                  %186 = sbr.rel target = $region53
                $region58: #{model_forward.1} parent=50 // loop_exit
                  _
              $region51: #{model_forward.1} parent=35 // pred_fallthru
                _
              // Predicated region
              $region59: #{model_forward.1} parent=35 // pred_check
                _
              $region60: #{model_forward.1} parent=35 // pred_check_branch
                %199 = sbr.rel target = $region62
              $region61: #{model_forward.1} parent=35 // pred_region
                _
              $region62: #{model_forward.1} parent=35 // pred_fallthru
                _
            $region36: #{model_forward.1} parent=31 // pred_fallthru
              _
            // Predicated region
            $region37: #{model_forward.1} parent=31 // pred_check
              _
            $region38: #{model_forward.1} parent=31 // pred_check_branch
              %170 = sbr.rel target = $region40
            $region39: #{model_forward.1} parent=31 // pred_region
              loop: start=0, step=1, limit=1
              $region41: #{model_forward.1} parent=39 // loop_pre_header
                _
              $region42: #{model_forward.1} parent=39 // loop_header
                %s173 = sphi 0, %s177
                %p174 = scmp.ge.s32.totalorder %s173, 1
                %s178 = sphi %s164, %s164
                %s179 = sphi %s162, %s162
              $region43: #{model_forward.1} parent=39 // loop_header_branch
                %176 = sbr.rel (%p174) target = $region47
              $region44: #{model_forward.1} parent=39 // loop_body
                %v180 = vld [vmem:[%s178] sm:$0xff]
                %181 = vst [vmem:[%s179] sm:$0xff] %v180
                %v182 = vld [vmem:[%s178 + $0x10] sm:$0xff]
                %183 = vst [vmem:[%s179 + $0x8] sm:$0xff] %v182
              $region45: #{model_forward.1} parent=39 // loop_footer
                %s177 = sadd.s32 1, %s173
              $region46: #{model_forward.1} parent=39 // loop_footer_branch
                %172 = sbr.rel target = $region42
              $region47: #{model_forward.1} parent=39 // loop_exit
                _
            $region40: #{model_forward.1} parent=31 // pred_fallthru
              _
          $region32: #{model_forward.1} parent=27 // pred_fallthru
            _
          %200 = vnop
        $region28: #{model_forward.1} parent=19 // pred_fallthru
          _
      $region20: #{model_forward.1} parent=5 // pred_fallthru
        _
      %p201 = scmp.le.s32.totalorder 1, %s15
      %p202 = scmp.lt.s32.totalorder %s15, 3
      %p203 = pnand %p201, %p202
      %p204 = pneg %p203
      // Predicated region
      $region63: #{model_forward.1} parent=5 // pred_check
        _
      $region64: #{model_forward.1} parent=5 // pred_check_branch
        %206 = sbr.rel (%p203) target = $region66
      $region65: #{model_forward.1} parent=5 // pred_region
        %s207 = ssub.s32 %s15, 1
        %s208 = sand.u32 %s28, 1
        %s209 = scalar_lea.sflag [#allocation3], %s208
        %s210 = sand.u32 %s28, 1
        %s211 = smul.addr %s210, 128
        %s212 = scalar_lea.vmem [#allocation2], %s211
        // Predicated region
        $region67: #{model_forward.1} parent=65 // pred_check
          %p213 = pneg %p41
        $region68: #{model_forward.1} parent=65 // pred_check_branch
          %215 = sbr.rel (%p213) target = $region70
        $region69: #{model_forward.1} parent=65 // pred_region
          %216 = dma.done %s209, 2048
        $region70: #{model_forward.1} parent=65 // pred_fallthru
          _
        %s217 = sand.u32 %s75, 1
        %s218 = sand.u32 %s75, 1
        %s219 = smul.addr %s218, 16
        %s220 = scalar_lea.vmem [#allocation5], %s219
        // Predicated region
        $region71: #{model_forward.1} parent=65 // pred_check
          %p221 = pneg %p88
        $region72: #{model_forward.1} parent=65 // pred_check_branch
          %223 = sbr.rel (%p221) target = $region74
        $region73: #{model_forward.1} parent=65 // pred_region
          _
        $region74: #{model_forward.1} parent=65 // pred_fallthru
          _
        %s224 = sand.u32 %s28, 1
        %s225 = scalar_lea.sflag [#allocation3], %s224
        %s226 = sand.u32 %s28, 1
        %s227 = smul.addr %s226, 128
        %s228 = scalar_lea.vmem [#allocation2], %s227
        %p229 = pneg %p41
        %p230 = pneg %p38
        %p231 = pneg %p62
        %p232 = pneg %p59
        %s233 = sand.u32 %s75, 1
        %s234 = sand.u32 %s75, 1
        %s235 = smul.addr %s234, 16
        %s236 = scalar_lea.vmem [#allocation5], %s235
        %p237 = pneg %p88
        %p238 = pneg %p85
        %p239 = pneg %p114
        %p240 = pneg %p111
        %s241 = sand.u32 %s101, 1
        %s242 = scalar_lea.sflag [#allocation4], %s241
        %s243 = sand.u32 %s101, 1
        %s244 = smul.addr %s243, 128
        %s245 = scalar_lea.vmem [#allocation6], %s244
        %v246 = vld [vmem:[%s1] sm:$0xff]
        %v247 = vld [vmem:[%s1 + $0x8] sm:$0xff]
        %v248 = vld [vmem:[%s1 + $0x10] sm:$0xff]
        %v249 = vld [vmem:[%s1 + $0x18] sm:$0xff]
        %v250 = vld [vmem:[%s1 + $0x20] sm:$0xff]
        %v251 = vld [vmem:[%s1 + $0x28] sm:$0xff]
        %v252 = vld [vmem:[%s1 + $0x30] sm:$0xff]
        %v253 = vld [vmem:[%s1 + $0x38] sm:$0xff]
        %v254 = vld [vmem:[%s1 + $0x40] sm:$0xff]
        %v255 = vld [vmem:[%s1 + $0x48] sm:$0xff]
        %v256 = vld [vmem:[%s1 + $0x50] sm:$0xff]
        %v257 = vld [vmem:[%s1 + $0x58] sm:$0xff]
        %v258 = vld [vmem:[%s1 + $0x60] sm:$0xff]
        %v259 = vld [vmem:[%s1 + $0x68] sm:$0xff]
        %v260 = vld [vmem:[%s1 + $0x70] sm:$0xff]
        %v261 = vld [vmem:[%s1 + $0x78] sm:$0xff]
        %v262 = vld [vmem:[%s220] sm:$0xff]
        %v263 = vld [vmem:[%s220 + $0x8] sm:$0xf]
        %vm264 = vcmask 97280
        %v266 = vsel %vm264, %v246, 0
        %v269 = vsel %vm264, %v247, 0
        %v272 = vsel %vm264, %v248, 0
        %v275 = vsel %vm264, %v249, 0
        %v278 = vsel %vm264, %v250, 0
        %v281 = vsel %vm264, %v251, 0
        %v284 = vsel %vm264, %v252, 0
        %v287 = vsel %vm264, %v253, 0
        %v290 = vsel %vm264, %v254, 0
        %v293 = vsel %vm264, %v255, 0
        %v296 = vsel %vm264, %v256, 0
        %v299 = vsel %vm264, %v257, 0
        %v302 = vsel %vm264, %v258, 0
        %v305 = vsel %vm264, %v259, 0
        %v308 = vsel %vm264, %v260, 0
        %v311 = vsel %vm264, %v261, 0
        %vm313 = vcmask 1043456
        %v315 = vsel %vm313, %v263, 0
        %317 = vmatprep.subr.mxu0 0.0
        %318 = vmatpush1.msra.mxu0 %v262
        %319 = vmatprep.subr.mxu0 0.0
        %320 = vmatpush1.msra.mxu0 %v315
        %321 = vmatprep.subr.mxu0 0.0
        %322 = vmatpush1.msra.mxu0 0.0
        %323 = vmatprep.subr.mxu0 0.0
        %324 = vmatpush1.msra.mxu0 0.0
        %325 = vmatprep.subr.mxu0 0.0
        %326 = vmatpush1.msra.mxu0 0.0
        %327 = vmatprep.subr.mxu0 0.0
        %328 = vmatpush1.msra.mxu0 0.0
        %329 = vmatprep.subr.mxu0 0.0
        %330 = vmatpush1.msra.mxu0 0.0
        %331 = vmatprep.subr.mxu0 0.0
        %332 = vmatpush1.msra.mxu0 0.0
        %333 = vmatprep.subr.mxu0 0.0
        %334 = vmatpush1.msra.mxu0 0.0
        %335 = vmatprep.subr.mxu0 0.0
        %336 = vmatpush1.msra.mxu0 0.0
        %337 = vmatprep.subr.mxu0 0.0
        %338 = vmatpush1.msra.mxu0 0.0
        %339 = vmatprep.subr.mxu0 0.0
        %340 = vmatpush1.msra.mxu0 0.0
        %341 = vmatprep.subr.mxu0 0.0
        %342 = vmatpush1.msra.mxu0 0.0
        %343 = vmatprep.subr.mxu0 0.0
        %344 = vmatpush1.msra.mxu0 0.0
        %345 = vmatprep.subr.mxu0 0.0
        %346 = vmatpush1.msra.mxu0 0.0
        %347 = vmatprep.subr.mxu0 0.0
        %348 = vmatpush1.msra.mxu0 0.0
        %349 = vmatprep.subr.mxu0 0.0
        %350 = vmatpush1.msra.mxu0 0.0
        %351 = vmatprep.subr.mxu0 0.0
        %352 = vmatpush1.msra.mxu0 0.0
        %353 = vmatprep.subr.mxu0 0.0
        %354 = vmatpush1.msra.mxu0 0.0
        %355 = vmatprep.subr.mxu0 0.0
        %356 = vmatpush1.msra.mxu0 0.0
        %357 = vmatprep.subr.mxu0 0.0
        %358 = vmatpush1.msra.mxu0 0.0
        %359 = vmatprep.subr.mxu0 0.0
        %360 = vmatpush1.msra.mxu0 0.0
        %361 = vmatprep.subr.mxu0 0.0
        %362 = vmatpush1.msra.mxu0 0.0
        %363 = vmatprep.subr.mxu0 0.0
        %364 = vmatpush1.msra.mxu0 0.0
        %365 = vmatprep.subr.mxu0 0.0
        %366 = vmatpush1.msra.mxu0 0.0
        %367 = vmatprep.subr.mxu0 0.0
        %368 = vmatpush1.msra.mxu0 0.0
        %369 = vmatprep.subr.mxu0 0.0
        %370 = vmatpush1.msra.mxu0 0.0
        %371 = vmatprep.subr.mxu0 0.0
        %372 = vmatpush1.msra.mxu0 0.0
        %373 = vmatprep.subr.mxu0 0.0
        %374 = vmatpush1.msra.mxu0 0.0
        %375 = vmatprep.subr.mxu0 0.0
        %376 = vmatpush1.msra.mxu0 0.0
        %377 = vmatprep.subr.mxu0 0.0
        %378 = vmatpush1.msra.mxu0 0.0
        %379 = vmatprep.subr.mxu0 0.0
        %380 = vmatpush1.msra.mxu0 0.0
        %381 = vmatprep.mubr.f32.mxu0 0.0
        %382 = vmatmul.mubr.f32.gmra.mrb[0].mxu0 %v266
        %v383 = vpop.f32.mrb[0].mxu0
        %v384 = vadd.f32 0.0, %v383
        %v385 = vpop.f32.mrb[0].mxu0
        %386 = vmatprep.mubr.f32.mxu0 0.0
        %387 = vmatmul.mubr.f32.gmra.mrb[0].mxu0 %v269
        %v388 = vpop.f32.mrb[0].mxu0
        %v389 = vadd.f32 0.0, %v388
        %v390 = vpop.f32.mrb[0].mxu0
        %391 = vmatprep.mubr.f32.mxu0 0.0
        %392 = vmatmul.mubr.f32.gmra.mrb[0].mxu0 %v272
        %v393 = vpop.f32.mrb[0].mxu0
        %v394 = vadd.f32 0.0, %v393
        %v395 = vpop.f32.mrb[0].mxu0
        %396 = vmatprep.mubr.f32.mxu0 0.0
        %397 = vmatmul.mubr.f32.gmra.mrb[0].mxu0 %v275
        %v398 = vpop.f32.mrb[0].mxu0
        %v399 = vadd.f32 0.0, %v398
        %v400 = vpop.f32.mrb[0].mxu0
        %401 = vmatprep.mubr.f32.mxu0 0.0
        %402 = vmatmul.mubr.f32.gmra.mrb[0].mxu0 %v278
        %v403 = vpop.f32.mrb[0].mxu0
        %v404 = vadd.f32 0.0, %v403
        %v405 = vpop.f32.mrb[0].mxu0
        %406 = vmatprep.mubr.f32.mxu0 0.0
        %407 = vmatmul.mubr.f32.gmra.mrb[0].mxu0 %v281
        %v408 = vpop.f32.mrb[0].mxu0
        %v409 = vadd.f32 0.0, %v408
        %v410 = vpop.f32.mrb[0].mxu0
        %411 = vmatprep.mubr.f32.mxu0 0.0
        %412 = vmatmul.mubr.f32.gmra.mrb[0].mxu0 %v284
        %v413 = vpop.f32.mrb[0].mxu0
        %v414 = vadd.f32 0.0, %v413
        %v415 = vpop.f32.mrb[0].mxu0
        %416 = vmatprep.mubr.f32.mxu0 0.0
        %417 = vmatmul.mubr.f32.gmra.mrb[0].mxu0 %v287
        %v418 = vpop.f32.mrb[0].mxu0
        %v419 = vadd.f32 0.0, %v418
        %v420 = vpop.f32.mrb[0].mxu0
        %421 = vmatprep.mubr.f32.mxu0 0.0
        %422 = vmatmul.mubr.f32.gmra.mrb[0].mxu0 %v290
        %v423 = vpop.f32.mrb[0].mxu0
        %v424 = vadd.f32 0.0, %v423
        %v425 = vpop.f32.mrb[0].mxu0
        %426 = vmatprep.mubr.f32.mxu0 0.0
        %427 = vmatmul.mubr.f32.gmra.mrb[0].mxu0 %v293
        %v428 = vpop.f32.mrb[0].mxu0
        %v429 = vadd.f32 0.0, %v428
        %v430 = vpop.f32.mrb[0].mxu0
        %431 = vmatprep.mubr.f32.mxu0 0.0
        %432 = vmatmul.mubr.f32.gmra.mrb[0].mxu0 %v296
        %v433 = vpop.f32.mrb[0].mxu0
        %v434 = vadd.f32 0.0, %v433
        %v435 = vpop.f32.mrb[0].mxu0
        %436 = vmatprep.mubr.f32.mxu0 0.0
        %437 = vmatmul.mubr.f32.gmra.mrb[0].mxu0 %v299
        %v438 = vpop.f32.mrb[0].mxu0
        %v439 = vadd.f32 0.0, %v438
        %v440 = vpop.f32.mrb[0].mxu0
        %441 = vmatprep.mubr.f32.mxu0 0.0
        %442 = vmatmul.mubr.f32.gmra.mrb[0].mxu0 %v302
        %v443 = vpop.f32.mrb[0].mxu0
        %v444 = vadd.f32 0.0, %v443
        %v445 = vpop.f32.mrb[0].mxu0
        %446 = vmatprep.mubr.f32.mxu0 0.0
        %447 = vmatmul.mubr.f32.gmra.mrb[0].mxu0 %v305
        %v448 = vpop.f32.mrb[0].mxu0
        %v449 = vadd.f32 0.0, %v448
        %v450 = vpop.f32.mrb[0].mxu0
        %451 = vmatprep.mubr.f32.mxu0 0.0
        %452 = vmatmul.mubr.f32.gmra.mrb[0].mxu0 %v308
        %v453 = vpop.f32.mrb[0].mxu0
        %v454 = vadd.f32 0.0, %v453
        %v455 = vpop.f32.mrb[0].mxu0
        %456 = vmatprep.mubr.f32.mxu0 0.0
        %457 = vmatmul.mubr.f32.gmra.mrb[0].mxu0 %v311
        %v458 = vpop.f32.mrb[0].mxu0
        %v459 = vadd.f32 0.0, %v458
        %v460 = vpop.f32.mrb[0].mxu0
        %461 = vdwg.mxu0
        %v462 = vld [vmem:[%s212] sm:$0xff]
        %v463 = vld [vmem:[%s212 + $0x8] sm:$0xff]
        %v464 = vld [vmem:[%s212 + $0x10] sm:$0xff]
        %v465 = vld [vmem:[%s212 + $0x18] sm:$0xff]
        %v466 = vld [vmem:[%s212 + $0x20] sm:$0xff]
        %v467 = vld [vmem:[%s212 + $0x28] sm:$0xff]
        %v468 = vld [vmem:[%s212 + $0x30] sm:$0xff]
        %v469 = vld [vmem:[%s212 + $0x38] sm:$0xff]
        %v470 = vld [vmem:[%s212 + $0x40] sm:$0xff]
        %v471 = vld [vmem:[%s212 + $0x48] sm:$0xff]
        %v472 = vld [vmem:[%s212 + $0x50] sm:$0xff]
        %v473 = vld [vmem:[%s212 + $0x58] sm:$0xff]
        %v474 = vld [vmem:[%s212 + $0x60] sm:$0xff]
        %v475 = vld [vmem:[%s212 + $0x68] sm:$0xff]
        %v476 = vld [vmem:[%s212 + $0x70] sm:$0xff]
        %v477 = vld [vmem:[%s212 + $0x78] sm:$0xff]
        %v478 = vadd.f32 %v462, %v384
        %v479 = vadd.f32 %v463, %v389
        %v480 = vadd.f32 %v464, %v394
        %v481 = vadd.f32 %v465, %v399
        %v482 = vadd.f32 %v466, %v404
        %v483 = vadd.f32 %v467, %v409
        %v484 = vadd.f32 %v468, %v414
        %v485 = vadd.f32 %v469, %v419
        %v486 = vadd.f32 %v470, %v424
        %v487 = vadd.f32 %v471, %v429
        %v488 = vadd.f32 %v472, %v434
        %v489 = vadd.f32 %v473, %v439
        %v490 = vadd.f32 %v474, %v444
        %v491 = vadd.f32 %v475, %v449
        %v492 = vadd.f32 %v476, %v454
        %v493 = vadd.f32 %v477, %v459
        %494 = vst [vmem:[%s245] sm:$0xff] %v478
        %495 = vst [vmem:[%s245 + $0x8] sm:$0xff] %v479
        %496 = vst [vmem:[%s245 + $0x10] sm:$0xff] %v480
        %497 = vst [vmem:[%s245 + $0x18] sm:$0xff] %v481
        %498 = vst [vmem:[%s245 + $0x20] sm:$0xff] %v482
        %499 = vst [vmem:[%s245 + $0x28] sm:$0xff] %v483
        %500 = vst [vmem:[%s245 + $0x30] sm:$0xff] %v484
        %501 = vst [vmem:[%s245 + $0x38] sm:$0xff] %v485
        %502 = vst [vmem:[%s245 + $0x40] sm:$0xff] %v486
        %503 = vst [vmem:[%s245 + $0x48] sm:$0xff] %v487
        %504 = vst [vmem:[%s245 + $0x50] sm:$0xff] %v488
        %505 = vst [vmem:[%s245 + $0x58] sm:$0xff] %v489
        %506 = vst [vmem:[%s245 + $0x60] sm:$0xff] %v490
        %507 = vst [vmem:[%s245 + $0x68] sm:$0xff] %v491
        %508 = vst [vmem:[%s245 + $0x70] sm:$0xff] %v492
        %509 = vst [vmem:[%s245 + $0x78] sm:$0xff] %v493
        %s510 = sand.u32 %s101, 1
        %s511 = scalar_lea.sflag [#allocation4], %s510
        %s512 = sand.u32 %s101, 1
        %s513 = smul.addr %s512, 128
        %s514 = scalar_lea.vmem [#allocation6], %s513
        // Predicated region
        $region75: #{model_forward.1} parent=65 // pred_check
          %p515 = pneg %p111
        $region76: #{model_forward.1} parent=65 // pred_check_branch
          %517 = sbr.rel (%p515) target = $region78
        $region77: #{model_forward.1} parent=65 // pred_region
          %s519 = ssub.s32 2048, 2048
          %520 = vsyncadd %s511, %s519
          %s521 = smul.addr %s20, 128
          %s522 = scalar_lea.hbm %s3, %s521
          %s523 = sshll.u32 %s514, 4
          %s524 = int_to_ptr.vmem [resolvable:$true] %s523
          %529 = dma.vmem_to_hbm [thread:$0]  %s524, 2048, %s522, %s511, 128, 256, 8
        $region78: #{model_forward.1} parent=65 // pred_fallthru
          _
      $region66: #{model_forward.1} parent=5 // pred_fallthru
        _
      %p530 = scmp.le.s32.totalorder 2, %s15
      // Predicated region
      $region79: #{model_forward.1} parent=5 // pred_check
        %p531 = pneg %p530
      $region80: #{model_forward.1} parent=5 // pred_check_branch
        %533 = sbr.rel (%p531) target = $region82
      $region81: #{model_forward.1} parent=5 // pred_region
        %s534 = ssub.s32 %s15, 2
        // Predicated region
        $region83: #{model_forward.1} parent=81 // pred_check
          %p535 = pneg %p117
        $region84: #{model_forward.1} parent=81 // pred_check_branch
          %537 = sbr.rel (%p535) target = $region86
        $region85: #{model_forward.1} parent=81 // pred_region
          %s538 = sand.u32 %s102, 1
          %s539 = scalar_lea.sflag [#allocation4], %s538
          %s540 = sand.u32 %s102, 1
          %s541 = smul.addr %s540, 128
          %s542 = scalar_lea.vmem [#allocation6], %s541
          %543 = dma.done %s539, 2048
        $region86: #{model_forward.1} parent=81 // pred_fallthru
          _
      $region82: #{model_forward.1} parent=5 // pred_fallthru
        _
    $region6: #{model_forward.1} parent=1 // loop_footer
      %s19 = sadd.s32 1, %s15
    $region7: #{model_forward.1} parent=1 // loop_footer_branch
      %14 = sbr.rel target = $region3
    $region8: #{model_forward.1} parent=1 // loop_exit
      _
    %544 = vsyncpa [#allocation3], 1
    %s545 = scalar_lea.sflag [#allocation3], 1
    %546 = vsyncpa %s545, 1
    %547 = vsyncpa [#allocation4], 1
    %s548 = scalar_lea.sflag [#allocation4], 1
    %549 = vsyncpa %s548, 1

</llo_original>
